<compile_context>
chip_gen: v6e
topology: v6e:2x2x1
jax: 0.10.0
libtpu: 0.0.40
codegen_flags: <defaults>
</compile_context>

<pallas_src>
import functools

import jax
import jax.numpy as jnp
from jax.experimental import pallas as pl
from jax.experimental.pallas import tpu as pltpu


# ------------------------------ Pallas kernel -------------------------------


def _moe_expert_kernel(tile_e_ref, tile_valid_ref,                 # SMEM prefetch
                       x_ref, w1_ref, w3_ref, w2_ref, wcol_ref,    # inputs
                       out_ref,                                    # output
                       acc_ref):                                   # VMEM scratch
    """One (token-tile, I-slab) step of the sorted-dispatch expert MLP.

    Each token tile belongs to exactly one expert (tile_e_ref[t]); the
    intermediate dim I is streamed in tile_i slabs and reduced into a f32
    accumulator.  Routing weights are folded into the activation before the
    down-projection, so the output rows already carry their routing weight
    (padding rows have weight 0 and come out exactly zero).
    """
    t = pl.program_id(0)
    i = pl.program_id(1)

    @pl.when(i == 0)
    def _():
        acc_ref[...] = jnp.zeros_like(acc_ref)

    @pl.when(tile_valid_ref[t] > 0)
    def _():
        x = x_ref[...]                                    # (tT, H)  input dtype
        w1 = w1_ref[0]                                    # (H, tI)
        w3 = w3_ref[0]                                    # (H, tI)
        w2 = w2_ref[0]                                    # (tI, H)
        h1 = jnp.dot(x, w1, preferred_element_type=jnp.float32)   # (tT, tI)
        h3 = jnp.dot(x, w3, preferred_element_type=jnp.float32)   # (tT, tI)
        h = (h1 * jax.nn.sigmoid(h1)) * h3                # SiLU gate, f32
        h = h * wcol_ref[...]                             # fold routing wt (f32)
        acc_ref[...] += jnp.dot(h.astype(x.dtype), w2,
                                preferred_element_type=jnp.float32)  # (tT, H)

    @pl.when(i == pl.num_programs(1) - 1)
    def _():
        out_ref[...] = acc_ref[...].astype(out_ref.dtype)


# ------------------------------- Tile sizing --------------------------------


def _round_up(x, m):
    return ((x + m - 1) // m) * m


def _largest_divisor_leq(n, target):
    t = max(1, min(int(target), int(n)))
    while n % t:
        t -= 1
    return t


def _hardware_budget():
    """Per-generation VMEM budget / tile targets (v5e/v6e: 128 MiB, v7x: 64 MiB)."""
    vmem_cap = 64 * 1024 * 1024                     # conservative default (v7x)
    try:
        info = pltpu.get_tpu_info()
        cap = getattr(info, "vmem_capacity_bytes", None)
        if cap:
            vmem_cap = int(cap)
    except Exception:
        pass
    if vmem_cap >= 100 * 1024 * 1024:               # v5e / v6e (128 MiB VMEM)
        return dict(max_tile_t=1024, weight_block_bytes=4 * 1024 * 1024,
                    vmem_limit=100 * 1024 * 1024)
    # v7x: 64 MiB physical per TC -> leave headroom for Mosaic internal scratch.
    return dict(max_tile_t=512, weight_block_bytes=2 * 1024 * 1024,
                vmem_limit=52 * 1024 * 1024)


def _choose_tiles(total_rows, H, I, x_itemsize, w_itemsize, budget):
    tile_t = min(budget["max_tile_t"], _round_up(max(int(total_rows), 1), 32))
    target_i = max(128, budget["weight_block_bytes"] // max(1, H * w_itemsize))
    if target_i > 128:
        target_i -= target_i % 128
    tile_i = _largest_divisor_leq(I, target_i)

    def working_set(tt, ti):
        return (2 * tt * H * x_itemsize             # x tile, double buffered
                + 2 * tt * H * x_itemsize           # out tile, double buffered
                + tt * H * 4                        # f32 accumulator scratch
                + 2 * 3 * ti * H * w_itemsize       # w1/w3/w2 slabs, 2x buffered
                + 4 * tt * 4)                       # routing-weight column

    # Shrink until the working set fits the per-generation budget.
    while (working_set(tile_t, tile_i) > budget["vmem_limit"]
           and tile_i > 128 and tile_i % 2 == 0):
        tile_i //= 2
    while working_set(tile_t, tile_i) > budget["vmem_limit"] and tile_t > 32:
        tile_t = max(32, tile_t // 2)
    return tile_t, tile_i


# ------------------------------ Pallas wrapper -------------------------------


def _moe_experts_sorted(x_sorted, w1, w3, w2, w_col, tile_expert, tile_valid,
                        *, tile_t, tile_i, vmem_limit):
    """Grouped expert MLP over expert-sorted rows: y[r] = w[r]*MLP_{e(r)}(x[r])."""
    Tsort, H = x_sorted.shape
    E, _, I = w1.shape
    n_t = Tsort // tile_t
    n_i = I // tile_i

    w_item = jnp.dtype(w1.dtype).itemsize
    x_item = jnp.dtype(x_sorted.dtype).itemsize
    cost = pl.CostEstimate(
        flops=int(6 * Tsort * I * H),
        transcendentals=int(Tsort * I),
        bytes_accessed=int(n_t * 3 * I * H * w_item      # weights re-streamed per token tile
                           + 2 * Tsort * H * x_item      # x read + y write
                           + Tsort * 4))

    grid_spec = pltpu.PrefetchScalarGridSpec(
        num_scalar_prefetch=2,
        grid=(n_t, n_i),
        in_specs=[
            pl.BlockSpec((tile_t, H), lambda t, i, te, tv: (t, 0)),
            # Weight slabs: expert id comes from the prefetched schedule; for
            # inactive (all-padding) tiles the slab index is frozen (i*valid)
            # so the unchanged block index skips the weight DMA entirely.
            pl.BlockSpec((1, H, tile_i), lambda t, i, te, tv: (te[t], 0, i * tv[t])),
            pl.BlockSpec((1, H, tile_i), lambda t, i, te, tv: (te[t], 0, i * tv[t])),
            pl.BlockSpec((1, tile_i, H), lambda t, i, te, tv: (te[t], i * tv[t], 0)),
            pl.BlockSpec((tile_t, 1), lambda t, i, te, tv: (t, 0)),
        ],
        out_specs=pl.BlockSpec((tile_t, H), lambda t, i, te, tv: (t, 0)),
        scratch_shapes=[pltpu.VMEM((tile_t, H), jnp.float32)],
    )

    return pl.pallas_call(
        _moe_expert_kernel,
        out_shape=jax.ShapeDtypeStruct((Tsort, H), x_sorted.dtype),
        grid_spec=grid_spec,
        compiler_params=pltpu.CompilerParams(
            dimension_semantics=("parallel", "arbitrary"),
            vmem_limit_bytes=int(vmem_limit)),
        cost_estimate=cost,
    )(tile_expert, tile_valid, x_sorted, w1, w3, w2, w_col)


@functools.partial(jax.jit, static_argnames=("num_experts_per_tok",))
def mixtral_sparse_moe_block(hidden_states, gate_w, w1, w3, w2,
                             num_experts_per_tok=2):
    """MixtralSparseMoeBlock forward.

    Weight layouts are MXU-native (transposed once at load time from the
    torch nn.Linear convention):
        gate_w: (E, H)      router Linear weight
        w1, w3: (E, H, I)   up / gate projections
        w2:     (E, I, H)   down projection
    """
    input_shape = hidden_states.shape
    H = input_shape[-1]
    x2d = hidden_states.reshape(-1, H)
    T = x2d.shape[0]
    E, _, I = w1.shape
    K = num_experts_per_tok
    TK = T * K

    budget = _hardware_budget()
    tile_t, tile_i = _choose_tiles(
        TK, H, I, jnp.dtype(x2d.dtype).itemsize, jnp.dtype(w1.dtype).itemsize,
        budget)

    # ---- routing: gate matmul + f32 softmax + top-k (tiny; plain XLA) ----
    logits = jax.lax.dot_general(x2d, gate_w, (((1,), (1,)), ((), ())),
                                 preferred_element_type=jnp.float32)   # (T, E)
    probs = jax.nn.softmax(logits, axis=-1)
    topw, sel = jax.lax.top_k(probs, K)                                # (T, K)
    topw = topw / jnp.sum(topw, axis=-1, keepdims=True)

    # ---- megablocks-style dispatch: sort (token, expert) pairs by expert ----
    flat_e = sel.reshape(TK).astype(jnp.int32)
    flat_w = topw.reshape(TK).astype(jnp.float32)
    flat_tok = jnp.arange(TK, dtype=jnp.int32) // K

    order = jnp.argsort(flat_e)
    e_sorted = flat_e[order]
    tok_sorted = flat_tok[order]
    w_sorted = flat_w[order]

    group_sizes = jnp.bincount(flat_e, length=E).astype(jnp.int32)       # (E,)
    padded_sizes = ((group_sizes + tile_t - 1) // tile_t) * tile_t
    zero = jnp.zeros((1,), jnp.int32)
    padded_starts = jnp.concatenate(
        [zero, jnp.cumsum(padded_sizes)[:-1]]).astype(jnp.int32)
    group_starts = jnp.concatenate(
        [zero, jnp.cumsum(group_sizes)[:-1]]).astype(jnp.int32)

    # Destination of every assignment in the expert-sorted, tile-padded buffer.
    within = jnp.arange(TK, dtype=jnp.int32) - group_starts[e_sorted]
    dest = padded_starts[e_sorted] + within                              # (TK,)

    # Static bound on padded rows: sum_e ceil(g_e/tile_t) <= TK//tile_t + E.
    Tsort = tile_t * (TK // tile_t + E)
    n_tiles = Tsort // tile_t

    tok_pad = jnp.full((Tsort,), T, jnp.int32).at[dest].set(tok_sorted)  # T = dummy row
    w_pad = jnp.zeros((Tsort,), jnp.float32).at[dest].set(w_sorted)

    x_ext = jnp.concatenate([x2d, jnp.zeros((1, H), x2d.dtype)], axis=0)  # (T+1, H)
    x_sorted = x_ext[tok_pad]                                             # (Tsort, H)
    w_col = w_pad.reshape(Tsort, 1)

    # ---- per-tile schedule (scalar-prefetched into SMEM) ----
    padded_ends = jnp.cumsum(padded_sizes)
    n_active_tiles = jnp.sum(padded_sizes) // tile_t
    tile_ids = jnp.arange(n_tiles, dtype=jnp.int32)
    tile_valid = (tile_ids < n_active_tiles).astype(jnp.int32)
    tile_expert_raw = jnp.clip(
        jnp.searchsorted(padded_ends, tile_ids * tile_t, side="right"),
        0, E - 1).astype(jnp.int32)
    last_e = tile_expert_raw[jnp.maximum(n_active_tiles - 1, 0)]
    # Inactive tiles repeat the last active expert so their weight DMA is skipped.
    tile_expert = jnp.where(tile_valid > 0, tile_expert_raw, last_e).astype(jnp.int32)

    # ---- Pallas hot path: grouped expert MLP with folded routing weights ----
    y_sorted = _moe_experts_sorted(
        x_sorted, w1, w3, w2, w_col, tile_expert, tile_valid,
        tile_t=tile_t, tile_i=tile_i, vmem_limit=budget["vmem_limit"])

    # ---- scatter-add back to token order (padding rows land on dummy row T) ----
    out_ext = jnp.zeros((T + 1, H), hidden_states.dtype).at[tok_pad].add(y_sorted)
    return out_ext[:T].reshape(input_shape)


# ----------------------------------- Main ------------------------------------


if __name__ == "__main__":
    batch_size = 2
    seq_len = 8
    hidden_dim = 32
    intermediate_dim = 64
    num_experts = 8
    num_experts_per_tok = 2

    key = jax.random.PRNGKey(0)
    kx, kg, k1, k3, k2 = jax.random.split(key, 5)

    x = jax.random.normal(kx, (batch_size, seq_len, hidden_dim), jnp.float32)
    gate_w = jax.random.normal(kg, (num_experts, hidden_dim), jnp.float32) * 0.05
    # MXU-native expert-weight layout (one-time transpose of nn.Linear weights
    # at load time): w1/w3 (E, H, I), w2 (E, I, H).
    w1 = jax.random.normal(
        k1, (num_experts, hidden_dim, intermediate_dim), jnp.float32) * 0.05
    w3 = jax.random.normal(
        k3, (num_experts, hidden_dim, intermediate_dim), jnp.float32) * 0.05
    w2 = jax.random.normal(
        k2, (num_experts, intermediate_dim, hidden_dim), jnp.float32) * 0.05

    out = mixtral_sparse_moe_block(
        x, gate_w, w1, w3, w2, num_experts_per_tok=num_experts_per_tok)
    out = jax.block_until_ready(out)
    assert out.shape == x.shape

    # Pure-JAX (XLA) reference for sanity.
    x2d = x.reshape(-1, hidden_dim)
    logits = jax.lax.dot_general(x2d, gate_w, (((1,), (1,)), ((), ())),
                                 preferred_element_type=jnp.float32)
    probs = jax.nn.softmax(logits, axis=-1)
    topw_r, sel_r = jax.lax.top_k(probs, num_experts_per_tok)
    topw_r = topw_r / jnp.sum(topw_r, axis=-1, keepdims=True)
    dense_r = jnp.sum(
        jax.nn.one_hot(sel_r, num_experts, dtype=jnp.float32)
        * topw_r[..., None], axis=1)
    hi = jax.lax.Precision.HIGHEST
    ref = jnp.zeros_like(x2d)
    for e in range(num_experts):
        h = (jax.nn.silu(jnp.dot(x2d, w1[e], precision=hi))
             * jnp.dot(x2d, w3[e], precision=hi))
        ref = ref + dense_r[:, e:e + 1] * jnp.dot(h, w2[e], precision=hi)
    ref = ref.reshape(x.shape)

    max_err = float(jnp.max(jnp.abs(out - ref)))
    assert jnp.allclose(out, ref, atol=1e-3, rtol=1e-2), (
        f"mismatch vs reference, max|diff|={max_err}")

    # bf16 smoke run (production dtype: bf16 operands, f32 accumulation).
    out_bf16 = mixtral_sparse_moe_block(
        x.astype(jnp.bfloat16), gate_w.astype(jnp.bfloat16),
        w1.astype(jnp.bfloat16), w3.astype(jnp.bfloat16),
        w2.astype(jnp.bfloat16), num_experts_per_tok=num_experts_per_tok)
    out_bf16 = jax.block_until_ready(out_bf16)
    assert out_bf16.shape == x.shape
    assert bool(jnp.all(jnp.isfinite(out_bf16.astype(jnp.float32))))

    print("KERNEL_OK")
</pallas_src>

<mosaic_0001>
module attributes {stable_mosaic.version = 11 : i64} {
  func.func private @main(%arg0: i32) attributes {dimension_semantics = [#tpu.dimension_semantics<core_parallel>], iteration_bounds = array<i64: 2>, tpu.core_type = #tpu.core_type<sc_scalar_subcore>, window_params = []} {
    return
  }
}

module attributes {stable_mosaic.version = 11 : i64} {
  func.func private @main(%arg0: i32) attributes {dimension_semantics = [#tpu.dimension_semantics<core_parallel>], iteration_bounds = array<i64: 2>, tpu.core_type = #tpu.core_type<sc_scalar_subcore>, window_params = []} {
    return
  }
}

module attributes {stable_mosaic.version = 11 : i64} {
  func.func @_moe_expert_kernel(%arg0: i32, %arg1: i32, %arg2: memref<9xi32, #tpu.memory_space<smem>>, %arg3: memref<9xi32, #tpu.memory_space<smem>>, %arg4: memref<32x32xf32, #tpu.memory_space<vmem>>, %arg5: memref<1x32x64xf32, #tpu.memory_space<vmem>>, %arg6: memref<1x32x64xf32, #tpu.memory_space<vmem>>, %arg7: memref<1x64x32xf32, #tpu.memory_space<vmem>>, %arg8: memref<32x1xf32, #tpu.memory_space<vmem>>, %arg9: memref<32x32xf32, #tpu.memory_space<vmem>>, %arg10: memref<32x32xf32, #tpu.memory_space<vmem>>) attributes {dimension_semantics = [#tpu.dimension_semantics<parallel>, #tpu.dimension_semantics<arbitrary>], iteration_bounds = array<i64: 9, 1>, scalar_prefetch = 2 : i64, scratch_operands = 1 : i64, tpu.core_type = #tpu.core_type<tc>, window_params = [{transform_indices = @transform_0, window_bounds = array<i64: 32, 32>}, {transform_indices = @transform_1, window_bounds = array<i64: 1, 32, 64>}, {transform_indices = @transform_2, window_bounds = array<i64: 1, 32, 64>}, {transform_indices = @transform_3, window_bounds = array<i64: 1, 64, 32>}, {transform_indices = @transform_4, window_bounds = array<i64: 32, 1>}, {transform_indices = @transform_5, window_bounds = array<i64: 32, 32>}]} {
    %c0_i32 = arith.constant 0 : i32
    %0 = arith.cmpi eq, %arg1, %c0_i32 : i32
    %1 = arith.extui %0 : i1 to i32
    %c0_i32_0 = arith.constant 0 : i32
    %2 = arith.cmpi ne, %1, %c0_i32_0 : i32
    scf.if %2 {
      %cst = arith.constant 0.000000e+00 : f32
      %11 = vector.broadcast %cst : f32 to vector<32x32xf32>
      %c0 = arith.constant 0 : index
      %c0_5 = arith.constant 0 : index
      %12 = vector.load %arg10[%c0, %c0_5] : memref<32x32xf32, #tpu.memory_space<vmem>>, vector<32x32xf32>
      tpu.vector_store %arg10[%c0, %c0_5], %11 {strides = array<i32>} : memref<32x32xf32, #tpu.memory_space<vmem>>, vector<32x32xf32>,
    } else {
    }
    %3 = arith.index_cast %arg0 : i32 to index
    %4 = memref.load %arg3[%3] : memref<9xi32, #tpu.memory_space<smem>>
    %c0_i32_1 = arith.constant 0 : i32
    %5 = arith.cmpi sgt, %4, %c0_i32_1 : i32
    %6 = arith.extui %5 : i1 to i32
    %c0_i32_2 = arith.constant 0 : i32
    %7 = arith.cmpi ne, %6, %c0_i32_2 : i32
    scf.if %7 {
      %c0 = arith.constant 0 : index
      %c0_5 = arith.constant 0 : index
      %11 = vector.load %arg4[%c0, %c0_5] : memref<32x32xf32, #tpu.memory_space<vmem>>, vector<32x32xf32>
      %c0_6 = arith.constant 0 : index
      %c0_7 = arith.constant 0 : index
      %c0_8 = arith.constant 0 : index
      %12 = vector.load %arg5[%c0_6, %c0_7, %c0_8] : memref<1x32x64xf32, #tpu.memory_space<vmem>>, vector<1x32x64xf32>
      %13 = vector.shape_cast %12 : vector<1x32x64xf32> to vector<32x64xf32>
      %c0_9 = arith.constant 0 : index
      %c0_10 = arith.constant 0 : index
      %c0_11 = arith.constant 0 : index
      %14 = vector.load %arg6[%c0_9, %c0_10, %c0_11] : memref<1x32x64xf32, #tpu.memory_space<vmem>>, vector<1x32x64xf32>
      %15 = vector.shape_cast %14 : vector<1x32x64xf32> to vector<32x64xf32>
      %c0_12 = arith.constant 0 : index
      %c0_13 = arith.constant 0 : index
      %c0_14 = arith.constant 0 : index
      %16 = vector.load %arg7[%c0_12, %c0_13, %c0_14] : memref<1x64x32xf32, #tpu.memory_space<vmem>>, vector<1x64x32xf32>
      %17 = vector.shape_cast %16 : vector<1x64x32xf32> to vector<64x32xf32>
      %cst = arith.constant dense<0.000000e+00> : vector<32x64xf32>
      %18 = tpu.matmul %11, %13, %cst {dimension_numbers = #tpu.dot_dimension_numbers<[1], [0], [0], [1], [0, 0, 1, 1], [], []>} : vector<32x32xf32>, vector<32x64xf32>, vector<32x64xf32> -> vector<32x64xf32>
      %cst_15 = arith.constant dense<0.000000e+00> : vector<32x64xf32>
      %19 = tpu.matmul %11, %15, %cst_15 {dimension_numbers = #tpu.dot_dimension_numbers<[1], [0], [0], [1], [0, 0, 1, 1], [], []>} : vector<32x32xf32>, vector<32x64xf32>, vector<32x64xf32> -> vector<32x64xf32>
      %20 = arith.negf %18 : vector<32x64xf32>
      %21 = math.exp %20 : vector<32x64xf32>
      %cst_16 = arith.constant 1.000000e+00 : f32
      %22 = vector.broadcast %cst_16 : f32 to vector<32x64xf32>
      %23 = arith.addf %22, %21 : vector<32x64xf32>
      %24 = arith.divf %22, %23 : vector<32x64xf32>
      %25 = arith.mulf %18, %24 : vector<32x64xf32>
      %26 = arith.mulf %25, %19 : vector<32x64xf32>
      %c0_17 = arith.constant 0 : index
      %c0_18 = arith.constant 0 : index
      %27 = vector.load %arg8[%c0_17, %c0_18] : memref<32x1xf32, #tpu.memory_space<vmem>>, vector<32x1xf32>
      %28 = vector.broadcast %27 : vector<32x1xf32> to vector<32x64xf32>
      %29 = arith.mulf %26, %28 : vector<32x64xf32>
      %c0_19 = arith.constant 0 : index
      %c0_20 = arith.constant 0 : index
      %30 = vector.load %arg10[%c0_19, %c0_20] : memref<32x32xf32, #tpu.memory_space<vmem>>, vector<32x32xf32>
      %cst_21 = arith.constant dense<0.000000e+00> : vector<32x32xf32>
      %31 = tpu.matmul %29, %17, %cst_21 {dimension_numbers = #tpu.dot_dimension_numbers<[1], [0], [0], [1], [0, 0, 1, 1], [], []>} : vector<32x64xf32>, vector<64x32xf32>, vector<32x32xf32> -> vector<32x32xf32>
      %32 = arith.addf %30, %31 : vector<32x32xf32>
      %c0_22 = arith.constant 0 : index
      %c0_23 = arith.constant 0 : index
      %33 = vector.load %arg10[%c0_22, %c0_23] : memref<32x32xf32, #tpu.memory_space<vmem>>, vector<32x32xf32>
      tpu.vector_store %arg10[%c0_22, %c0_23], %32 {strides = array<i32>} : memref<32x32xf32, #tpu.memory_space<vmem>>, vector<32x32xf32>,
    } else {
    }
    %c0_i32_3 = arith.constant 0 : i32
    %8 = arith.cmpi eq, %arg1, %c0_i32_3 : i32
    %9 = arith.extui %8 : i1 to i32
    %c0_i32_4 = arith.constant 0 : i32
    %10 = arith.cmpi ne, %9, %c0_i32_4 : i32
    scf.if %10 {
      %c0 = arith.constant 0 : index
      %c0_5 = arith.constant 0 : index
      %11 = vector.load %arg10[%c0, %c0_5] : memref<32x32xf32, #tpu.memory_space<vmem>>, vector<32x32xf32>
      %c0_6 = arith.constant 0 : index
      %c0_7 = arith.constant 0 : index
      %12 = vector.load %arg9[%c0_6, %c0_7] : memref<32x32xf32, #tpu.memory_space<vmem>>, vector<32x32xf32>
      tpu.vector_store %arg9[%c0_6, %c0_7], %11 {strides = array<i32>} : memref<32x32xf32, #tpu.memory_space<vmem>>, vector<32x32xf32>,
    } else {
    }
    return
  }
  func.func @transform_0(%arg0: i32, %arg1: i32, %arg2: memref<9xi32, #tpu.memory_space<smem>>, %arg3: memref<9xi32, #tpu.memory_space<smem>>) -> (i32, i32) {
    %c0_i32 = arith.constant 0 : i32
    %c0_i32_0 = arith.constant 0 : i32
    return %arg0, %c0_i32 : i32, i32
  }
  func.func @transform_1(%arg0: i32, %arg1: i32, %arg2: memref<9xi32, #tpu.memory_space<smem>>, %arg3: memref<9xi32, #tpu.memory_space<smem>>) -> (i32, i32, i32) {
    %0 = arith.index_cast %arg0 : i32 to index
    %1 = memref.load %arg2[%0] : memref<9xi32, #tpu.memory_space<smem>>
    %2 = arith.index_cast %arg0 : i32 to index
    %3 = memref.load %arg3[%2] : memref<9xi32, #tpu.memory_space<smem>>
    %4 = arith.muli %arg1, %3 : i32
    %c0_i32 = arith.constant 0 : i32
    %c0_i32_0 = arith.constant 0 : i32
    return %1, %c0_i32, %4 : i32, i32, i32
  }
  func.func @transform_2(%arg0: i32, %arg1: i32, %arg2: memref<9xi32, #tpu.memory_space<smem>>, %arg3: memref<9xi32, #tpu.memory_space<smem>>) -> (i32, i32, i32) {
    %0 = arith.index_cast %arg0 : i32 to index
    %1 = memref.load %arg2[%0] : memref<9xi32, #tpu.memory_space<smem>>
    %2 = arith.index_cast %arg0 : i32 to index
    %3 = memref.load %arg3[%2] : memref<9xi32, #tpu.memory_space<smem>>
    %4 = arith.muli %arg1, %3 : i32
    %c0_i32 = arith.constant 0 : i32
    %c0_i32_0 = arith.constant 0 : i32
    return %1, %c0_i32, %4 : i32, i32, i32
  }
  func.func @transform_3(%arg0: i32, %arg1: i32, %arg2: memref<9xi32, #tpu.memory_space<smem>>, %arg3: memref<9xi32, #tpu.memory_space<smem>>) -> (i32, i32, i32) {
    %0 = arith.index_cast %arg0 : i32 to index
    %1 = memref.load %arg2[%0] : memref<9xi32, #tpu.memory_space<smem>>
    %2 = arith.index_cast %arg0 : i32 to index
    %3 = memref.load %arg3[%2] : memref<9xi32, #tpu.memory_space<smem>>
    %4 = arith.muli %arg1, %3 : i32
    %c0_i32 = arith.constant 0 : i32
    %c0_i32_0 = arith.constant 0 : i32
    return %1, %4, %c0_i32 : i32, i32, i32
  }
  func.func @transform_4(%arg0: i32, %arg1: i32, %arg2: memref<9xi32, #tpu.memory_space<smem>>, %arg3: memref<9xi32, #tpu.memory_space<smem>>) -> (i32, i32) {
    %c0_i32 = arith.constant 0 : i32
    %c0_i32_0 = arith.constant 0 : i32
    return %arg0, %c0_i32 : i32, i32
  }
  func.func @transform_5(%arg0: i32, %arg1: i32, %arg2: memref<9xi32, #tpu.memory_space<smem>>, %arg3: memref<9xi32, #tpu.memory_space<smem>>) -> (i32, i32) {
    %c0_i32 = arith.constant 0 : i32
    %c0_i32_0 = arith.constant 0 : i32
    return %arg0, %c0_i32 : i32, i32
  }
}

</mosaic_0001>

<llo_original>
// kernel: custom-call.1
$region0: #{custom-call.1}
  %s0 = inlined_call_operand.vmem [shape: u32[9], index: 0, kind: output, shape index: {}]

// kernel: mixtral_sparse_moe_block.1
$region0: #{mixtral_sparse_moe_block.1}
  #allocation0 [shape = 'u32[]', space=smem, size = 0x4, offset = 0x4, fixed_abs, tag = 'smem constant byte address 0x4 - core index']
  #allocation1 [shape = 'u32[144,128]{1,0:T(1,128)}', space=vmem, size = 0x12000, scoped, tag = 'internal scratch']
  #allocation2 [shape = 'f32[32,32]{1,0:T(8,128)}', space=vmem, size = 0x4000, scoped, tag = 'scratch operand']
  #allocation3 [shape = 's32[1]{0}', space=sflag, size = 0x4, scoped, tag = 'scoped memory for mixtral_sparse_moe_block.1']
  #allocation4 [shape = 'u8[512]{0}', space=smem, size = 0x200, scoped, tag = 'prefetched SMEM operand 0']
  #allocation5 [shape = 'u8[512]{0}', space=smem, size = 0x200, scoped, tag = 'prefetched SMEM operand 1']
  %s0 = inlined_call_operand.vmem [shape: s32[9], index: 0, kind: input, shape index: {}]
  %s1 = inlined_call_operand.vmem [shape: s32[9], index: 1, kind: input, shape index: {}]
  %s2 = inlined_call_operand.vmem [shape: f32[288,32], index: 2, kind: input, shape index: {}]
  %s3 = inlined_call_operand.vmem [shape: f32[8,32,64], index: 3, kind: input, shape index: {}]
  %s4 = inlined_call_operand.vmem [shape: f32[8,32,64], index: 4, kind: input, shape index: {}]
  %s5 = inlined_call_operand.vmem [shape: f32[8,64,32], index: 5, kind: input, shape index: {}]
  %s6 = inlined_call_operand.vmem [shape: f32[288,1], index: 6, kind: input, shape index: {}]
  %s7 = inlined_call_operand.vmem [shape: f32[288,32], index: 7, kind: output, shape index: {}]
  %s8 = sld [smem:[#allocation0]]
  $region65: #{mixtral_sparse_moe_block.1} parent=0
    _
  %s10 = ssub.s32 1, %s8
  %s11 = scalar_select 0, %s10, %s8
  %s12 = sshll.u32 %s0, 4
  %s13 = int_to_ptr.vmem [resolvable:$true] %s12
  %15 = dma.vmem_to_smem %s13, 16, [#allocation4], [#allocation3]
  %s16 = sshll.u32 %s1, 4
  %s17 = int_to_ptr.vmem [resolvable:$true] %s16
  %19 = dma.vmem_to_smem %s17, 16, [#allocation5], [#allocation3]
  %20 = dma.done [#allocation3], 32
  %21 = sfence
  loop: start=0, step=1, limit=11
  $region2: #{mixtral_sparse_moe_block.1} parent=0 // loop_pre_header
    _
  $region3: #{mixtral_sparse_moe_block.1} parent=0 // loop_header
    %s23 = sphi 0, %s27
    %p24 = scmp.ge.s32.totalorder %s23, 11
    %s30 = sphi 0, %s42
    %s31 = sphi 0, %s38
    %s32 = sphi 0, %s30
    %s33 = sphi 0, %s31
    %s34 = sphi 0, %s32
    %s35 = sphi 0, %s33
    %s45 = sphi 0, %s47
    %s48 = sphi 0, %s45
    %s49 = sphi 0, %s48
    %s65 = sphi 0, %s49
    %s79 = sphi 0, %s81
    %s82 = sphi 0, %s79
    %s83 = sphi 0, %s82
    %s99 = sphi 0, %s83
    %s113 = sphi 0, %s115
    %s116 = sphi 0, %s113
    %s117 = sphi 0, %s116
    %s133 = sphi 0, %s117
    %s147 = sphi 0, %s149
    %s150 = sphi 0, %s147
    %s151 = sphi 0, %s150
    %s167 = sphi 0, %s151
    %s173 = sphi 0, %s175
    %s176 = sphi 0, %s173
    %s177 = sphi 0, %s176
    %s193 = sphi 0, %s177
    %s199 = sphi 0, %s201
    %s202 = sphi 0, %s199
    %s203 = sphi 0, %s202
    %s219 = sphi 0, %s203
  $region4: #{mixtral_sparse_moe_block.1} parent=0 // loop_header_branch
    %26 = sbr.rel (%p24) target = $region8
  $region5: #{mixtral_sparse_moe_block.1} parent=0 // loop_body
    %s28 = ssub.s32 %s23, 1
    %s29 = ssub.s32 %s23, 2
    %s36 = sadd.s32 1, %s31
    %p37 = scmp.ge.s32.totalorder %s36, 1
    %s38 = scalar_select %p37, 0, %s36
    %s39 = sadd.s32 1, %s30
    %s40 = scalar_select %p37, %s39, %s30
    %p41 = scmp.ge.s32.totalorder %s40, 9
    %s42 = scalar_select %p41, 0, %s40
    %s43 = ssub.s32 %s30, %s42
    %p44 = scmp.eq.s32.totalorder %s43, 0
    %s46 = sadd.s32 %s45, 1
    %s47 = scalar_select %p44, %s45, %s46
    %p50 = pneg %p44
    %p51 = scmp.eq.s32.totalorder %s23, 8
    %p52 = por %p50, %p51
    %p53 = scmp.ne.s32.totalorder %s45, %s48
    %p54 = scmp.eq.s32.totalorder %s23, 0
    %p55 = por %p53, %p54
    %p56 = scmp.ne.s32.totalorder %s45, %s48
    %p57 = scmp.eq.s32.totalorder %s28, 8
    %p58 = por %p56, %p57
    %p59 = scmp.ne.s32.totalorder %s48, %s49
    %p60 = scmp.eq.s32.totalorder %s28, 0
    %p61 = por %p59, %p60
    %p62 = scmp.ne.s32.totalorder %s48, %s49
    %p63 = scmp.eq.s32.totalorder %s29, 8
    %p64 = por %p62, %p63
    %p66 = scmp.ne.s32.totalorder %s49, %s65
    %p67 = scmp.eq.s32.totalorder %s29, 0
    %p68 = por %p66, %p67
    %s69 = sld [smem:[#allocation4 + %s30]]
    %s70 = sld [smem:[#allocation5 + %s30]]
    %s71 = smul.u32 %s31, %s70
    %s72 = sld [smem:[#allocation4 + %s42]]
    %s73 = sld [smem:[#allocation5 + %s42]]
    %s74 = smul.u32 %s38, %s73
    %s75 = ssub.s32 %s69, %s72
    %s76 = ssub.s32 %s71, %s74
    %s77 = sor.u32 %s75, %s76
    %p78 = scmp.eq.s32.totalorder %s77, 0
    %s80 = sadd.s32 %s79, 1
    %s81 = scalar_select %p78, %s79, %s80
    %p84 = pneg %p78
    %p85 = scmp.eq.s32.totalorder %s23, 8
    %p86 = por %p84, %p85
    %p87 = scmp.ne.s32.totalorder %s79, %s82
    %p88 = scmp.eq.s32.totalorder %s23, 0
    %p89 = por %p87, %p88
    %p90 = scmp.ne.s32.totalorder %s79, %s82
    %p91 = scmp.eq.s32.totalorder %s28, 8
    %p92 = por %p90, %p91
    %p93 = scmp.ne.s32.totalorder %s82, %s83
    %p94 = scmp.eq.s32.totalorder %s28, 0
    %p95 = por %p93, %p94
    %p96 = scmp.ne.s32.totalorder %s82, %s83
    %p97 = scmp.eq.s32.totalorder %s29, 8
    %p98 = por %p96, %p97
    %p100 = scmp.ne.s32.totalorder %s83, %s99
    %p101 = scmp.eq.s32.totalorder %s29, 0
    %p102 = por %p100, %p101
    %s103 = sld [smem:[#allocation4 + %s30]]
    %s104 = sld [smem:[#allocation5 + %s30]]
    %s105 = smul.u32 %s31, %s104
    %s106 = sld [smem:[#allocation4 + %s42]]
    %s107 = sld [smem:[#allocation5 + %s42]]
    %s108 = smul.u32 %s38, %s107
    %s109 = ssub.s32 %s103, %s106
    %s110 = ssub.s32 %s105, %s108
    %s111 = sor.u32 %s109, %s110
    %p112 = scmp.eq.s32.totalorder %s111, 0
    %s114 = sadd.s32 %s113, 1
    %s115 = scalar_select %p112, %s113, %s114
    %p118 = pneg %p112
    %p119 = scmp.eq.s32.totalorder %s23, 8
    %p120 = por %p118, %p119
    %p121 = scmp.ne.s32.totalorder %s113, %s116
    %p122 = scmp.eq.s32.totalorder %s23, 0
    %p123 = por %p121, %p122
    %p124 = scmp.ne.s32.totalorder %s113, %s116
    %p125 = scmp.eq.s32.totalorder %s28, 8
    %p126 = por %p124, %p125
    %p127 = scmp.ne.s32.totalorder %s116, %s117
    %p128 = scmp.eq.s32.totalorder %s28, 0
    %p129 = por %p127, %p128
    %p130 = scmp.ne.s32.totalorder %s116, %s117
    %p131 = scmp.eq.s32.totalorder %s29, 8
    %p132 = por %p130, %p131
    %p134 = scmp.ne.s32.totalorder %s117, %s133
    %p135 = scmp.eq.s32.totalorder %s29, 0
    %p136 = por %p134, %p135
    %s137 = sld [smem:[#allocation4 + %s30]]
    %s138 = sld [smem:[#allocation5 + %s30]]
    %s139 = smul.u32 %s31, %s138
    %s140 = sld [smem:[#allocation4 + %s42]]
    %s141 = sld [smem:[#allocation5 + %s42]]
    %s142 = smul.u32 %s38, %s141
    %s143 = ssub.s32 %s137, %s140
    %s144 = ssub.s32 %s139, %s142
    %s145 = sor.u32 %s143, %s144
    %p146 = scmp.eq.s32.totalorder %s145, 0
    %s148 = sadd.s32 %s147, 1
    %s149 = scalar_select %p146, %s147, %s148
    %p152 = pneg %p146
    %p153 = scmp.eq.s32.totalorder %s23, 8
    %p154 = por %p152, %p153
    %p155 = scmp.ne.s32.totalorder %s147, %s150
    %p156 = scmp.eq.s32.totalorder %s23, 0
    %p157 = por %p155, %p156
    %p158 = scmp.ne.s32.totalorder %s147, %s150
    %p159 = scmp.eq.s32.totalorder %s28, 8
    %p160 = por %p158, %p159
    %p161 = scmp.ne.s32.totalorder %s150, %s151
    %p162 = scmp.eq.s32.totalorder %s28, 0
    %p163 = por %p161, %p162
    %p164 = scmp.ne.s32.totalorder %s150, %s151
    %p165 = scmp.eq.s32.totalorder %s29, 8
    %p166 = por %p164, %p165
    %p168 = scmp.ne.s32.totalorder %s151, %s167
    %p169 = scmp.eq.s32.totalorder %s29, 0
    %p170 = por %p168, %p169
    %s171 = ssub.s32 %s30, %s42
    %p172 = scmp.eq.s32.totalorder %s171, 0
    %s174 = sadd.s32 %s173, 1
    %s175 = scalar_select %p172, %s173, %s174
    %p178 = pneg %p172
    %p179 = scmp.eq.s32.totalorder %s23, 8
    %p180 = por %p178, %p179
    %p181 = scmp.ne.s32.totalorder %s173, %s176
    %p182 = scmp.eq.s32.totalorder %s23, 0
    %p183 = por %p181, %p182
    %p184 = scmp.ne.s32.totalorder %s173, %s176
    %p185 = scmp.eq.s32.totalorder %s28, 8
    %p186 = por %p184, %p185
    %p187 = scmp.ne.s32.totalorder %s176, %s177
    %p188 = scmp.eq.s32.totalorder %s28, 0
    %p189 = por %p187, %p188
    %p190 = scmp.ne.s32.totalorder %s176, %s177
    %p191 = scmp.eq.s32.totalorder %s29, 8
    %p192 = por %p190, %p191
    %p194 = scmp.ne.s32.totalorder %s177, %s193
    %p195 = scmp.eq.s32.totalorder %s29, 0
    %p196 = por %p194, %p195
    %s197 = ssub.s32 %s30, %s42
    %p198 = scmp.eq.s32.totalorder %s197, 0
    %s200 = sadd.s32 %s199, 1
    %s201 = scalar_select %p198, %s199, %s200
    %p204 = pneg %p198
    %p205 = scmp.eq.s32.totalorder %s23, 8
    %p206 = por %p204, %p205
    %p207 = scmp.ne.s32.totalorder %s199, %s202
    %p208 = scmp.eq.s32.totalorder %s23, 0
    %p209 = por %p207, %p208
    %p210 = scmp.ne.s32.totalorder %s199, %s202
    %p211 = scmp.eq.s32.totalorder %s28, 8
    %p212 = por %p210, %p211
    %p213 = scmp.ne.s32.totalorder %s202, %s203
    %p214 = scmp.eq.s32.totalorder %s28, 0
    %p215 = por %p213, %p214
    %p216 = scmp.ne.s32.totalorder %s202, %s203
    %p217 = scmp.eq.s32.totalorder %s29, 8
    %p218 = por %p216, %p217
    %p220 = scmp.ne.s32.totalorder %s203, %s219
    %p221 = scmp.eq.s32.totalorder %s29, 0
    %p222 = por %p220, %p221
    %p223 = scmp.le.s32.totalorder 1, %s23
    %p224 = scmp.lt.s32.totalorder %s23, 10
    %p225 = pnand %p223, %p224
    %p226 = pneg %p225
    // Predicated region
    $region9: #{mixtral_sparse_moe_block.1} parent=5 // pred_check
      _
    $region10: #{mixtral_sparse_moe_block.1} parent=5 // pred_check_branch
      %228 = sbr.rel (%p225) target = $region12
    $region11: #{mixtral_sparse_moe_block.1} parent=5 // pred_region
      %s229 = ssub.s32 %s23, 1
    $region12: #{mixtral_sparse_moe_block.1} parent=5 // pred_fallthru
      _
    %p230 = scmp.lt.s32.totalorder %s23, 9
    // Predicated region
    $region13: #{mixtral_sparse_moe_block.1} parent=5 // pred_check
      %p231 = pneg %p230
    $region14: #{mixtral_sparse_moe_block.1} parent=5 // pred_check_branch
      %233 = sbr.rel (%p231) target = $region16
    $region15: #{mixtral_sparse_moe_block.1} parent=5 // pred_region
      // Predicated region
      $region17: #{mixtral_sparse_moe_block.1} parent=15 // pred_check
        %p234 = pneg %p55
      $region18: #{mixtral_sparse_moe_block.1} parent=15 // pred_check_branch
        %236 = sbr.rel (%p234) target = $region20
      $region19: #{mixtral_sparse_moe_block.1} parent=15 // pred_region
        %s237 = smul.u32 4, %s30
        %p238 = scmp.lt.s32.totalorder %s237, 35
        %s239 = scalar_select %p238, %s237, 35
        %s240 = smul.addr %s239, 8
        %s241 = scalar_lea.vmem %s2, %s240
        %s242 = smul.u32 4, %s30
      $region20: #{mixtral_sparse_moe_block.1} parent=15 // pred_fallthru
        _
      // Predicated region
      $region21: #{mixtral_sparse_moe_block.1} parent=15 // pred_check
        %p243 = pneg %p89
      $region22: #{mixtral_sparse_moe_block.1} parent=15 // pred_check_branch
        %245 = sbr.rel (%p243) target = $region24
      $region23: #{mixtral_sparse_moe_block.1} parent=15 // pred_region
        %s246 = sld [smem:[#allocation4 + %s30]]
        %s247 = sld [smem:[#allocation5 + %s30]]
        %s248 = smul.u32 %s31, %s247
        %p249 = scmp.lt.s32.totalorder %s246, 7
        %s250 = scalar_select %p249, %s246, 7
        %p251 = scmp.lt.s32.totalorder %s248, 0
        %s252 = scalar_select %p251, %s248, 0
        %s253 = smul.addr %s250, 4
        %s254 = sadd.s32 %s252, %s253
        %s255 = smul.addr %s254, 8
        %s256 = scalar_lea.vmem %s3, %s255
        %s257 = sld [smem:[#allocation4 + %s30]]
        %s258 = sld [smem:[#allocation5 + %s30]]
        %s259 = smul.u32 %s31, %s258
      $region24: #{mixtral_sparse_moe_block.1} parent=15 // pred_fallthru
        _
      // Predicated region
      $region25: #{mixtral_sparse_moe_block.1} parent=15 // pred_check
        %p260 = pneg %p123
      $region26: #{mixtral_sparse_moe_block.1} parent=15 // pred_check_branch
        %262 = sbr.rel (%p260) target = $region28
      $region27: #{mixtral_sparse_moe_block.1} parent=15 // pred_region
        %s263 = sld [smem:[#allocation4 + %s30]]
        %s264 = sld [smem:[#allocation5 + %s30]]
        %s265 = smul.u32 %s31, %s264
        %p266 = scmp.lt.s32.totalorder %s263, 7
        %s267 = scalar_select %p266, %s263, 7
        %p268 = scmp.lt.s32.totalorder %s265, 0
        %s269 = scalar_select %p268, %s265, 0
        %s270 = smul.addr %s267, 4
        %s271 = sadd.s32 %s269, %s270
        %s272 = smul.addr %s271, 8
        %s273 = scalar_lea.vmem %s4, %s272
        %s274 = sld [smem:[#allocation4 + %s30]]
        %s275 = sld [smem:[#allocation5 + %s30]]
        %s276 = smul.u32 %s31, %s275
      $region28: #{mixtral_sparse_moe_block.1} parent=15 // pred_fallthru
        _
      // Predicated region
      $region29: #{mixtral_sparse_moe_block.1} parent=15 // pred_check
        %p277 = pneg %p157
      $region30: #{mixtral_sparse_moe_block.1} parent=15 // pred_check_branch
        %279 = sbr.rel (%p277) target = $region32
      $region31: #{mixtral_sparse_moe_block.1} parent=15 // pred_region
        %s280 = sld [smem:[#allocation4 + %s30]]
        %s281 = sld [smem:[#allocation5 + %s30]]
        %s282 = smul.u32 %s31, %s281
        %s283 = smul.u32 8, %s282
        %p284 = scmp.lt.s32.totalorder %s280, 7
        %s285 = scalar_select %p284, %s280, 7
        %p286 = scmp.lt.s32.totalorder %s283, 7
        %s287 = scalar_select %p286, %s283, 7
        %s288 = smul.addr %s285, 8
        %s289 = sadd.s32 %s287, %s288
        %s290 = smul.addr %s289, 8
        %s291 = scalar_lea.vmem %s5, %s290
        %s292 = sld [smem:[#allocation4 + %s30]]
        %s293 = sld [smem:[#allocation5 + %s30]]
        %s294 = smul.u32 %s31, %s293
        %s295 = smul.u32 8, %s294
      $region32: #{mixtral_sparse_moe_block.1} parent=15 // pred_fallthru
        _
      // Predicated region
      $region33: #{mixtral_sparse_moe_block.1} parent=15 // pred_check
        %p296 = pneg %p183
      $region34: #{mixtral_sparse_moe_block.1} parent=15 // pred_check_branch
        %298 = sbr.rel (%p296) target = $region36
      $region35: #{mixtral_sparse_moe_block.1} parent=15 // pred_region
        %s299 = smul.u32 4, %s30
        %p300 = scmp.lt.s32.totalorder %s299, 35
        %s301 = scalar_select %p300, %s299, 35
        %s302 = smul.addr %s301, 8
        %s303 = scalar_lea.vmem %s6, %s302
        %s304 = smul.u32 4, %s30
      $region36: #{mixtral_sparse_moe_block.1} parent=15 // pred_fallthru
        _
    $region16: #{mixtral_sparse_moe_block.1} parent=5 // pred_fallthru
      _
    %p305 = scmp.le.s32.totalorder 1, %s23
    %p306 = scmp.lt.s32.totalorder %s23, 10
    %p307 = pnand %p305, %p306
    %p308 = pneg %p307
    // Predicated region
    $region37: #{mixtral_sparse_moe_block.1} parent=5 // pred_check
      _
    $region38: #{mixtral_sparse_moe_block.1} parent=5 // pred_check_branch
      %310 = sbr.rel (%p307) target = $region40
    $region39: #{mixtral_sparse_moe_block.1} parent=5 // pred_region
      %s311 = ssub.s32 %s23, 1
      %s312 = smul.u32 4, %s32
      %p313 = scmp.lt.s32.totalorder %s312, 35
      %s314 = scalar_select %p313, %s312, 35
      %s315 = smul.addr %s314, 8
      %s316 = scalar_lea.vmem %s2, %s315
      %p317 = pneg %p61
      %p318 = pneg %p58
      %s319 = sld [smem:[#allocation4 + %s32]]
      %s320 = sld [smem:[#allocation5 + %s32]]
      %s321 = smul.u32 %s33, %s320
      %p322 = scmp.lt.s32.totalorder %s319, 7
      %s323 = scalar_select %p322, %s319, 7
      %p324 = scmp.lt.s32.totalorder %s321, 0
      %s325 = scalar_select %p324, %s321, 0
      %s326 = smul.addr %s323, 4
      %s327 = sadd.s32 %s325, %s326
      %s328 = smul.addr %s327, 8
      %s329 = scalar_lea.vmem %s3, %s328
      %p330 = pneg %p95
      %p331 = pneg %p92
      %s332 = sld [smem:[#allocation4 + %s32]]
      %s333 = sld [smem:[#allocation5 + %s32]]
      %s334 = smul.u32 %s33, %s333
      %p335 = scmp.lt.s32.totalorder %s332, 7
      %s336 = scalar_select %p335, %s332, 7
      %p337 = scmp.lt.s32.totalorder %s334, 0
      %s338 = scalar_select %p337, %s334, 0
      %s339 = smul.addr %s336, 4
      %s340 = sadd.s32 %s338, %s339
      %s341 = smul.addr %s340, 8
      %s342 = scalar_lea.vmem %s4, %s341
      %p343 = pneg %p129
      %p344 = pneg %p126
      %s345 = sld [smem:[#allocation4 + %s32]]
      %s346 = sld [smem:[#allocation5 + %s32]]
      %s347 = smul.u32 %s33, %s346
      %s348 = smul.u32 8, %s347
      %p349 = scmp.lt.s32.totalorder %s345, 7
      %s350 = scalar_select %p349, %s345, 7
      %p351 = scmp.lt.s32.totalorder %s348, 7
      %s352 = scalar_select %p351, %s348, 7
      %s353 = smul.addr %s350, 8
      %s354 = sadd.s32 %s352, %s353
      %s355 = smul.addr %s354, 8
      %s356 = scalar_lea.vmem %s5, %s355
      %p357 = pneg %p163
      %p358 = pneg %p160
      %s359 = smul.u32 4, %s32
      %p360 = scmp.lt.s32.totalorder %s359, 35
      %s361 = scalar_select %p360, %s359, 35
      %s362 = smul.addr %s361, 8
      %s363 = scalar_lea.vmem %s6, %s362
      %p364 = pneg %p189
      %p365 = pneg %p186
      %p366 = pneg %p215
      %p367 = pneg %p212
      %s368 = smul.u32 4, %s32
      %p369 = scmp.lt.s32.totalorder %s368, 35
      %s370 = scalar_select %p369, %s368, 35
      %s371 = smul.addr %s370, 8
      %s372 = scalar_lea.vmem %s7, %s371
      %s373 = smul.u32 4, %s32
      %p374 = scmp.lt.s32.totalorder %s373, 35
      %s375 = scalar_select %p374, %s373, 35
      %s376 = smul.addr %s375, 8
      %s377 = scalar_lea.vmem %s2, %s376
      %s378 = smul.u32 4, %s32
      %s379 = sld [smem:[#allocation4 + %s32]]
      %s380 = sld [smem:[#allocation5 + %s32]]
      %s381 = smul.u32 %s33, %s380
      %p382 = scmp.lt.s32.totalorder %s379, 7
      %s383 = scalar_select %p382, %s379, 7
      %p384 = scmp.lt.s32.totalorder %s381, 0
      %s385 = scalar_select %p384, %s381, 0
      %s386 = smul.addr %s383, 4
      %s387 = sadd.s32 %s385, %s386
      %s388 = smul.addr %s387, 8
      %s389 = scalar_lea.vmem %s3, %s388
      %s390 = sld [smem:[#allocation4 + %s32]]
      %s391 = sld [smem:[#allocation5 + %s32]]
      %s392 = smul.u32 %s33, %s391
      %s393 = sld [smem:[#allocation4 + %s32]]
      %s394 = sld [smem:[#allocation5 + %s32]]
      %s395 = smul.u32 %s33, %s394
      %p396 = scmp.lt.s32.totalorder %s393, 7
      %s397 = scalar_select %p396, %s393, 7
      %p398 = scmp.lt.s32.totalorder %s395, 0
      %s399 = scalar_select %p398, %s395, 0
      %s400 = smul.addr %s397, 4
      %s401 = sadd.s32 %s399, %s400
      %s402 = smul.addr %s401, 8
      %s403 = scalar_lea.vmem %s4, %s402
      %s404 = sld [smem:[#allocation4 + %s32]]
      %s405 = sld [smem:[#allocation5 + %s32]]
      %s406 = smul.u32 %s33, %s405
      %s407 = sld [smem:[#allocation4 + %s32]]
      %s408 = sld [smem:[#allocation5 + %s32]]
      %s409 = smul.u32 %s33, %s408
      %s410 = smul.u32 8, %s409
      %p411 = scmp.lt.s32.totalorder %s407, 7
      %s412 = scalar_select %p411, %s407, 7
      %p413 = scmp.lt.s32.totalorder %s410, 7
      %s414 = scalar_select %p413, %s410, 7
      %s415 = smul.addr %s412, 8
      %s416 = sadd.s32 %s414, %s415
      %s417 = smul.addr %s416, 8
      %s418 = scalar_lea.vmem %s5, %s417
      %s419 = sld [smem:[#allocation4 + %s32]]
      %s420 = sld [smem:[#allocation5 + %s32]]
      %s421 = smul.u32 %s33, %s420
      %s422 = smul.u32 8, %s421
      %s423 = smul.u32 4, %s32
      %p424 = scmp.lt.s32.totalorder %s423, 35
      %s425 = scalar_select %p424, %s423, 35
      %s426 = smul.addr %s425, 8
      %s427 = scalar_lea.vmem %s6, %s426
      %s428 = smul.u32 4, %s32
      %s429 = smul.u32 4, %s32
      %p430 = scmp.lt.s32.totalorder %s429, 35
      %s431 = scalar_select %p430, %s429, 35
      %s432 = smul.addr %s431, 8
      %s433 = scalar_lea.vmem %s7, %s432
      %s434 = smul.u32 4, %s32
      %p435 = scmp.eq.s32.totalorder %s33, 0
      // Predicated region
      $region41: #{mixtral_sparse_moe_block.1} parent=39 // pred_check
        %p436 = pneg %p435
      $region42: #{mixtral_sparse_moe_block.1} parent=39 // pred_check_branch
        %438 = sbr.rel (%p436) target = $region44
      $region43: #{mixtral_sparse_moe_block.1} parent=39 // pred_region
        %vm439 = vcmask 261120
        %440 = vst.msk [vmem:[#allocation2] sm:$0xff] %vm439, 0.0
        %441 = vst.msk [vmem:[#allocation2 + $0x8] sm:$0xff] %vm439, 0.0
        %442 = vst.msk [vmem:[#allocation2 + $0x10] sm:$0xff] %vm439, 0.0
        %443 = vst.msk [vmem:[#allocation2 + $0x18] sm:$0xff] %vm439, 0.0
      $region44: #{mixtral_sparse_moe_block.1} parent=39 // pred_fallthru
        _
      %s444 = sld [smem:[#allocation5 + %s32]]
      %p445 = scmp.gt.s32.totalorder %s444, 0
      // Predicated region
      $region45: #{mixtral_sparse_moe_block.1} parent=39 // pred_check
        %p446 = pneg %p445
      $region46: #{mixtral_sparse_moe_block.1} parent=39 // pred_check_branch
        %448 = sbr.rel (%p446) target = $region48
      $region47: #{mixtral_sparse_moe_block.1} parent=39 // pred_region
        %v449 = vld [vmem:[%s377] sm:$0xff]
        %v450 = vld [vmem:[%s377 + $0x8] sm:$0xff]
        %v451 = vld [vmem:[%s377 + $0x10] sm:$0xff]
        %v452 = vld [vmem:[%s377 + $0x18] sm:$0xff]
        %v453 = vld [vmem:[%s389] sm:$0xff]
        %v454 = vld [vmem:[%s389 + $0x8] sm:$0xff]
        %v455 = vld [vmem:[%s389 + $0x10] sm:$0xff]
        %v456 = vld [vmem:[%s389 + $0x18] sm:$0xff]
        %v457 = vld [vmem:[%s403] sm:$0xff]
        %v458 = vld [vmem:[%s403 + $0x8] sm:$0xff]
        %v459 = vld [vmem:[%s403 + $0x10] sm:$0xff]
        %v460 = vld [vmem:[%s403 + $0x18] sm:$0xff]
        %v461 = vld [vmem:[%s418] sm:$0xff]
        %v462 = vld [vmem:[%s418 + $0x8] sm:$0xff]
        %v463 = vld [vmem:[%s418 + $0x10] sm:$0xff]
        %v464 = vld [vmem:[%s418 + $0x18] sm:$0xff]
        %v465 = vld [vmem:[%s418 + $0x20] sm:$0xff]
        %v466 = vld [vmem:[%s418 + $0x28] sm:$0xff]
        %v467 = vld [vmem:[%s418 + $0x30] sm:$0xff]
        %v468 = vld [vmem:[%s418 + $0x38] sm:$0xff]
        %vm469 = vcmask 261120
        %v471 = vsel %vm469, %v449, 0
        %v474 = vsel %vm469, %v450, 0
        %v477 = vsel %vm469, %v451, 0
        %v480 = vsel %vm469, %v452, 0
        %482 = vmatprep.subr.mxu0 0.0
        %483 = vmatpush1.msra.mxu0 0.0
        %484 = vmatprep.subr.mxu0 0.0
        %485 = vmatpush1.msra.mxu0 0.0
        %486 = vmatprep.subr.mxu0 0.0
        %487 = vmatpush1.msra.mxu0 0.0
        %488 = vmatprep.subr.mxu0 0.0
        %489 = vmatpush1.msra.mxu0 0.0
        %490 = vmatprep.subr.mxu0 0.0
        %491 = vmatpush1.msra.mxu0 0.0
        %492 = vmatprep.subr.mxu0 0.0
        %493 = vmatpush1.msra.mxu0 0.0
        %494 = vmatprep.subr.mxu0 0.0
        %495 = vmatpush1.msra.mxu0 0.0
        %496 = vmatprep.subr.mxu0 0.0
        %497 = vmatpush1.msra.mxu0 0.0
        %498 = vmatprep.subr.mxu0 0.0
        %499 = vmatpush1.msra.mxu0 0.0
        %500 = vmatprep.subr.mxu0 0.0
        %501 = vmatpush1.msra.mxu0 0.0
        %502 = vmatprep.subr.mxu0 0.0
        %503 = vmatpush1.msra.mxu0 0.0
        %504 = vmatprep.subr.mxu0 0.0
        %505 = vmatpush1.msra.mxu0 0.0
        %506 = vmatprep.subr.mxu0 0.0
        %507 = vmatpush1.msra.mxu0 %v456
        %508 = vmatprep.subr.mxu0 0.0
        %509 = vmatpush1.msra.mxu0 %v455
        %510 = vmatprep.subr.mxu0 0.0
        %511 = vmatpush1.msra.mxu0 %v454
        %512 = vmatprep.subr.mxu0 0.0
        %513 = vmatpush1.msra.mxu0 %v453
        %514 = vmatprep.subr.mxu0 0.0
        %515 = vmatpush2.msra.mxu0 0.0
        %516 = vmatprep.subr.mxu0 0.0
        %517 = vmatpush2.msra.mxu0 0.0
        %518 = vmatprep.subr.mxu0 0.0
        %519 = vmatpush2.msra.mxu0 0.0
        %520 = vmatprep.subr.mxu0 0.0
        %521 = vmatpush2.msra.mxu0 0.0
        %522 = vmatprep.subr.mxu0 0.0
        %523 = vmatpush2.msra.mxu0 0.0
        %524 = vmatprep.subr.mxu0 0.0
        %525 = vmatpush2.msra.mxu0 0.0
        %526 = vmatprep.subr.mxu0 0.0
        %527 = vmatpush2.msra.mxu0 0.0
        %528 = vmatprep.subr.mxu0 0.0
        %529 = vmatpush2.msra.mxu0 0.0
        %530 = vmatprep.subr.mxu0 0.0
        %531 = vmatpush2.msra.mxu0 0.0
        %532 = vmatprep.subr.mxu0 0.0
        %533 = vmatpush2.msra.mxu0 0.0
        %534 = vmatprep.subr.mxu0 0.0
        %535 = vmatpush2.msra.mxu0 0.0
        %536 = vmatprep.subr.mxu0 0.0
        %537 = vmatpush2.msra.mxu0 0.0
        %538 = vmatprep.subr.mxu0 0.0
        %539 = vmatpush2.msra.mxu0 0.0
        %540 = vmatprep.subr.mxu0 0.0
        %541 = vmatpush2.msra.mxu0 0.0
        %542 = vmatprep.subr.mxu0 0.0
        %543 = vmatpush2.msra.mxu0 0.0
        %544 = vmatprep.subr.mxu0 0.0
        %545 = vmatpush2.msra.mxu0 0.0
        %546 = vmatprep.mubr.f32.mxu0 0.0
        %547 = vmatmul.mubr.f32.gmra.mxu0 %v471
        %v548 = vpop.f32.mrf.mxu0
        %v549 = vadd.f32 0.0, %v548
        %v550 = vpop.f32.mrf.mxu0
        %551 = vmatprep.mubr.f32.mxu0 0.0
        %552 = vmatmul.mubr.f32.gmra.mxu0 %v474
        %v553 = vpop.f32.mrf.mxu0
        %v554 = vadd.f32 0.0, %v553
        %v555 = vpop.f32.mrf.mxu0
        %556 = vmatprep.mubr.f32.mxu0 0.0
        %557 = vmatmul.mubr.f32.gmra.mxu0 %v477
        %v558 = vpop.f32.mrf.mxu0
        %v559 = vadd.f32 0.0, %v558
        %v560 = vpop.f32.mrf.mxu0
        %561 = vmatprep.mubr.f32.mxu0 0.0
        %562 = vmatmul.mubr.f32.gmra.mxu0 %v480
        %v563 = vpop.f32.mrf.mxu0
        %v564 = vadd.f32 0.0, %v563
        %v565 = vpop.f32.mrf.mxu0
        %566 = vdwg.mxu0
        %567 = vmatprep.subr.mxu0 0.0
        %568 = vmatpush1.msra.mxu0 0.0
        %569 = vmatprep.subr.mxu0 0.0
        %570 = vmatpush1.msra.mxu0 0.0
        %571 = vmatprep.subr.mxu0 0.0
        %572 = vmatpush1.msra.mxu0 0.0
        %573 = vmatprep.subr.mxu0 0.0
        %574 = vmatpush1.msra.mxu0 0.0
        %575 = vmatprep.subr.mxu0 0.0
        %576 = vmatpush1.msra.mxu0 0.0
        %577 = vmatprep.subr.mxu0 0.0
        %578 = vmatpush1.msra.mxu0 0.0
        %579 = vmatprep.subr.mxu0 0.0
        %580 = vmatpush1.msra.mxu0 0.0
        %581 = vmatprep.subr.mxu0 0.0
        %582 = vmatpush1.msra.mxu0 0.0
        %583 = vmatprep.subr.mxu0 0.0
        %584 = vmatpush1.msra.mxu0 0.0
        %585 = vmatprep.subr.mxu0 0.0
        %586 = vmatpush1.msra.mxu0 0.0
        %587 = vmatprep.subr.mxu0 0.0
        %588 = vmatpush1.msra.mxu0 0.0
        %589 = vmatprep.subr.mxu0 0.0
        %590 = vmatpush1.msra.mxu0 0.0
        %591 = vmatprep.subr.mxu0 0.0
        %592 = vmatpush1.msra.mxu0 %v460
        %593 = vmatprep.subr.mxu0 0.0
        %594 = vmatpush1.msra.mxu0 %v459
        %595 = vmatprep.subr.mxu0 0.0
        %596 = vmatpush1.msra.mxu0 %v458
        %597 = vmatprep.subr.mxu0 0.0
        %598 = vmatpush1.msra.mxu0 %v457
        %599 = vmatprep.subr.mxu0 0.0
        %600 = vmatpush2.msra.mxu0 0.0
        %601 = vmatprep.subr.mxu0 0.0
        %602 = vmatpush2.msra.mxu0 0.0
        %603 = vmatprep.subr.mxu0 0.0
        %604 = vmatpush2.msra.mxu0 0.0
        %605 = vmatprep.subr.mxu0 0.0
        %606 = vmatpush2.msra.mxu0 0.0
        %607 = vmatprep.subr.mxu0 0.0
        %608 = vmatpush2.msra.mxu0 0.0
        %609 = vmatprep.subr.mxu0 0.0
        %610 = vmatpush2.msra.mxu0 0.0
        %611 = vmatprep.subr.mxu0 0.0
        %612 = vmatpush2.msra.mxu0 0.0
        %613 = vmatprep.subr.mxu0 0.0
        %614 = vmatpush2.msra.mxu0 0.0
        %615 = vmatprep.subr.mxu0 0.0
        %616 = vmatpush2.msra.mxu0 0.0
        %617 = vmatprep.subr.mxu0 0.0
        %618 = vmatpush2.msra.mxu0 0.0
        %619 = vmatprep.subr.mxu0 0.0
        %620 = vmatpush2.msra.mxu0 0.0
        %621 = vmatprep.subr.mxu0 0.0
        %622 = vmatpush2.msra.mxu0 0.0
        %623 = vmatprep.subr.mxu0 0.0
        %624 = vmatpush2.msra.mxu0 0.0
        %625 = vmatprep.subr.mxu0 0.0
        %626 = vmatpush2.msra.mxu0 0.0
        %627 = vmatprep.subr.mxu0 0.0
        %628 = vmatpush2.msra.mxu0 0.0
        %629 = vmatprep.subr.mxu0 0.0
        %630 = vmatpush2.msra.mxu0 0.0
        %631 = vmatprep.mubr.f32.mxu0 0.0
        %632 = vmatmul.mubr.f32.gmra.mxu0 %v471
        %v633 = vpop.f32.mrf.mxu0
        %v634 = vadd.f32 0.0, %v633
        %v635 = vpop.f32.mrf.mxu0
        %636 = vmatprep.mubr.f32.mxu0 0.0
        %637 = vmatmul.mubr.f32.gmra.mxu0 %v474
        %v638 = vpop.f32.mrf.mxu0
        %v639 = vadd.f32 0.0, %v638
        %v640 = vpop.f32.mrf.mxu0
        %641 = vmatprep.mubr.f32.mxu0 0.0
        %642 = vmatmul.mubr.f32.gmra.mxu0 %v477
        %v643 = vpop.f32.mrf.mxu0
        %v644 = vadd.f32 0.0, %v643
        %v645 = vpop.f32.mrf.mxu0
        %646 = vmatprep.mubr.f32.mxu0 0.0
        %647 = vmatmul.mubr.f32.gmra.mxu0 %v480
        %v648 = vpop.f32.mrf.mxu0
        %v649 = vadd.f32 0.0, %v648
        %v650 = vpop.f32.mrf.mxu0
        %651 = vdwg.mxu0
        %v652 = vxor.u32 %v549, 2147483648
        %v653 = vxor.u32 %v554, 2147483648
        %v654 = vxor.u32 %v559, 2147483648
        %v655 = vxor.u32 %v564, 2147483648
        %v656 = vmul.f32 %v652, 1.442695
        %v657 = vpow.pop %v656
        %v658 = vmul.f32 %v653, 1.442695
        %v659 = vpow.pop %v658
        %v660 = vmul.f32 %v654, 1.442695
        %v661 = vpow.pop %v660
        %v662 = vmul.f32 %v655, 1.442695
        %v663 = vpow.pop %v662
        %v664 = vadd.f32 %v657, 1.0
        %v665 = vadd.f32 %v659, 1.0
        %v666 = vadd.f32 %v661, 1.0
        %v667 = vadd.f32 %v663, 1.0
        %v668 = vrcp.pop %v664
        %v669 = vmul.f32 1.0, %v668
        %v670 = vrcp.pop %v665
        %v671 = vmul.f32 1.0, %v670
        %v672 = vrcp.pop %v666
        %v673 = vmul.f32 1.0, %v672
        %v674 = vrcp.pop %v667
        %v675 = vmul.f32 1.0, %v674
        %v676 = vmul.f32 %v549, %v669
        %v677 = vmul.f32 %v554, %v671
        %v678 = vmul.f32 %v559, %v673
        %v679 = vmul.f32 %v564, %v675
        %v680 = vmul.f32 %v676, %v634
        %v681 = vmul.f32 %v677, %v639
        %v682 = vmul.f32 %v678, %v644
        %v683 = vmul.f32 %v679, %v649
        %v684 = vld [vmem:[%s427] sm:$0xff]
        %v685 = vld [vmem:[%s427 + $0x8] sm:$0xff]
        %v686 = vld [vmem:[%s427 + $0x10] sm:$0xff]
        %v687 = vld [vmem:[%s427 + $0x18] sm:$0xff]
        %689 = vset.pattern.permute.xlu0 0
        %690 = vperm.xlu0 %689, %v684
        %v691 = vpop.permute.xlu0 %690
        %694 = vset.pattern.permute.xlu0 0
        %695 = vperm.xlu0 %694, %v685
        %v696 = vpop.permute.xlu0 %695
        %699 = vset.pattern.permute.xlu0 0
        %700 = vperm.xlu0 %699, %v686
        %v701 = vpop.permute.xlu0 %700
        %704 = vset.pattern.permute.xlu0 0
        %705 = vperm.xlu0 %704, %v687
        %v706 = vpop.permute.xlu0 %705
        %v708 = vmul.f32 %v680, %v691
        %v709 = vmul.f32 %v681, %v696
        %v710 = vmul.f32 %v682, %v701
        %v711 = vmul.f32 %v683, %v706
        %v712 = vld [vmem:[#allocation2] sm:$0xff]
        %v713 = vld [vmem:[#allocation2 + $0x8] sm:$0xff]
        %v714 = vld [vmem:[#allocation2 + $0x10] sm:$0xff]
        %v715 = vld [vmem:[#allocation2 + $0x18] sm:$0xff]
        %vm716 = vcmask 523264
        %v718 = vsel %vm716, %v708, 0
        %v721 = vsel %vm716, %v709, 0
        %v724 = vsel %vm716, %v710, 0
        %v727 = vsel %vm716, %v711, 0
        %729 = vmatprep.subr.mxu0 0.0
        %730 = vmatpush1.msra.mxu0 0.0
        %731 = vmatprep.subr.mxu0 0.0
        %732 = vmatpush1.msra.mxu0 0.0
        %733 = vmatprep.subr.mxu0 0.0
        %734 = vmatpush1.msra.mxu0 0.0
        %735 = vmatprep.subr.mxu0 0.0
        %736 = vmatpush1.msra.mxu0 0.0
        %737 = vmatprep.subr.mxu0 0.0
        %738 = vmatpush1.msra.mxu0 0.0
        %739 = vmatprep.subr.mxu0 0.0
        %740 = vmatpush1.msra.mxu0 0.0
        %741 = vmatprep.subr.mxu0 0.0
        %742 = vmatpush1.msra.mxu0 0.0
        %743 = vmatprep.subr.mxu0 0.0
        %744 = vmatpush1.msra.mxu0 0.0
        %745 = vmatprep.subr.mxu0 0.0
        %746 = vmatpush1.msra.mxu0 %v468
        %747 = vmatprep.subr.mxu0 0.0
        %748 = vmatpush1.msra.mxu0 %v467
        %749 = vmatprep.subr.mxu0 0.0
        %750 = vmatpush1.msra.mxu0 %v466
        %751 = vmatprep.subr.mxu0 0.0
        %752 = vmatpush1.msra.mxu0 %v465
        %753 = vmatprep.subr.mxu0 0.0
        %754 = vmatpush1.msra.mxu0 %v464
        %755 = vmatprep.subr.mxu0 0.0
        %756 = vmatpush1.msra.mxu0 %v463
        %757 = vmatprep.subr.mxu0 0.0
        %758 = vmatpush1.msra.mxu0 %v462
        %759 = vmatprep.subr.mxu0 0.0
        %760 = vmatpush1.msra.mxu0 %v461
        %761 = vmatprep.subr.mxu0 0.0
        %762 = vmatpush2.msra.mxu0 0.0
        %763 = vmatprep.subr.mxu0 0.0
        %764 = vmatpush2.msra.mxu0 0.0
        %765 = vmatprep.subr.mxu0 0.0
        %766 = vmatpush2.msra.mxu0 0.0
        %767 = vmatprep.subr.mxu0 0.0
        %768 = vmatpush2.msra.mxu0 0.0
        %769 = vmatprep.subr.mxu0 0.0
        %770 = vmatpush2.msra.mxu0 0.0
        %771 = vmatprep.subr.mxu0 0.0
        %772 = vmatpush2.msra.mxu0 0.0
        %773 = vmatprep.subr.mxu0 0.0
        %774 = vmatpush2.msra.mxu0 0.0
        %775 = vmatprep.subr.mxu0 0.0
        %776 = vmatpush2.msra.mxu0 0.0
        %777 = vmatprep.subr.mxu0 0.0
        %778 = vmatpush2.msra.mxu0 0.0
        %779 = vmatprep.subr.mxu0 0.0
        %780 = vmatpush2.msra.mxu0 0.0
        %781 = vmatprep.subr.mxu0 0.0
        %782 = vmatpush2.msra.mxu0 0.0
        %783 = vmatprep.subr.mxu0 0.0
        %784 = vmatpush2.msra.mxu0 0.0
        %785 = vmatprep.subr.mxu0 0.0
        %786 = vmatpush2.msra.mxu0 0.0
        %787 = vmatprep.subr.mxu0 0.0
        %788 = vmatpush2.msra.mxu0 0.0
        %789 = vmatprep.subr.mxu0 0.0
        %790 = vmatpush2.msra.mxu0 0.0
        %791 = vmatprep.subr.mxu0 0.0
        %792 = vmatpush2.msra.mxu0 0.0
        %793 = vmatprep.mubr.f32.mxu0 0.0
        %794 = vmatmul.mubr.f32.gmra.mxu0 %v718
        %v795 = vpop.f32.mrf.mxu0
        %v796 = vadd.f32 0.0, %v795
        %v797 = vpop.f32.mrf.mxu0
        %798 = vmatprep.mubr.f32.mxu0 0.0
        %799 = vmatmul.mubr.f32.gmra.mxu0 %v721
        %v800 = vpop.f32.mrf.mxu0
        %v801 = vadd.f32 0.0, %v800
        %v802 = vpop.f32.mrf.mxu0
        %803 = vmatprep.mubr.f32.mxu0 0.0
        %804 = vmatmul.mubr.f32.gmra.mxu0 %v724
        %v805 = vpop.f32.mrf.mxu0
        %v806 = vadd.f32 0.0, %v805
        %v807 = vpop.f32.mrf.mxu0
        %808 = vmatprep.mubr.f32.mxu0 0.0
        %809 = vmatmul.mubr.f32.gmra.mxu0 %v727
        %v810 = vpop.f32.mrf.mxu0
        %v811 = vadd.f32 0.0, %v810
        %v812 = vpop.f32.mrf.mxu0
        %813 = vdwg.mxu0
        %v814 = vadd.f32 %v712, %v796
        %v815 = vadd.f32 %v713, %v801
        %v816 = vadd.f32 %v714, %v806
        %v817 = vadd.f32 %v715, %v811
        %818 = vst.msk [vmem:[#allocation2] sm:$0xff] %vm469, %v814
        %819 = vst.msk [vmem:[#allocation2 + $0x8] sm:$0xff] %vm469, %v815
        %820 = vst.msk [vmem:[#allocation2 + $0x10] sm:$0xff] %vm469, %v816
        %821 = vst.msk [vmem:[#allocation2 + $0x18] sm:$0xff] %vm469, %v817
      $region48: #{mixtral_sparse_moe_block.1} parent=39 // pred_fallthru
        _
      // Predicated region
      $region49: #{mixtral_sparse_moe_block.1} parent=39 // pred_check
        %p822 = pneg %p435
      $region50: #{mixtral_sparse_moe_block.1} parent=39 // pred_check_branch
        %824 = sbr.rel (%p822) target = $region52
      $region51: #{mixtral_sparse_moe_block.1} parent=39 // pred_region
        %v825 = vld [vmem:[#allocation2] sm:$0xff]
        %v826 = vld [vmem:[#allocation2 + $0x8] sm:$0xff]
        %v827 = vld [vmem:[#allocation2 + $0x10] sm:$0xff]
        %v828 = vld [vmem:[#allocation2 + $0x18] sm:$0xff]
        %vm829 = vcmask 261120
        %830 = vst.msk [vmem:[%s433] sm:$0xff] %vm829, %v825
        %831 = vst.msk [vmem:[%s433 + $0x8] sm:$0xff] %vm829, %v826
        %832 = vst.msk [vmem:[%s433 + $0x10] sm:$0xff] %vm829, %v827
        %833 = vst.msk [vmem:[%s433 + $0x18] sm:$0xff] %vm829, %v828
      $region52: #{mixtral_sparse_moe_block.1} parent=39 // pred_fallthru
        _
      %s834 = smul.u32 4, %s32
      %p835 = scmp.lt.s32.totalorder %s834, 35
      %s836 = scalar_select %p835, %s834, 35
      %s837 = smul.addr %s836, 8
      %s838 = scalar_lea.vmem %s7, %s837
      // Predicated region
      $region53: #{mixtral_sparse_moe_block.1} parent=39 // pred_check
        %p839 = pneg %p212
      $region54: #{mixtral_sparse_moe_block.1} parent=39 // pred_check_branch
        %841 = sbr.rel (%p839) target = $region56
      $region55: #{mixtral_sparse_moe_block.1} parent=39 // pred_region
        %s842 = smul.u32 4, %s32
      $region56: #{mixtral_sparse_moe_block.1} parent=39 // pred_fallthru
        _
    $region40: #{mixtral_sparse_moe_block.1} parent=5 // pred_fallthru
      _
    %p843 = scmp.le.s32.totalorder 2, %s23
    // Predicated region
    $region57: #{mixtral_sparse_moe_block.1} parent=5 // pred_check
      %p844 = pneg %p843
    $region58: #{mixtral_sparse_moe_block.1} parent=5 // pred_check_branch
      %846 = sbr.rel (%p844) target = $region60
    $region59: #{mixtral_sparse_moe_block.1} parent=5 // pred_region
      %s847 = ssub.s32 %s23, 2
      // Predicated region
      $region61: #{mixtral_sparse_moe_block.1} parent=59 // pred_check
        %p848 = pneg %p218
      $region62: #{mixtral_sparse_moe_block.1} parent=59 // pred_check_branch
        %850 = sbr.rel (%p848) target = $region64
      $region63: #{mixtral_sparse_moe_block.1} parent=59 // pred_region
        %s851 = smul.u32 4, %s34
        %p852 = scmp.lt.s32.totalorder %s851, 35
        %s853 = scalar_select %p852, %s851, 35
        %s854 = smul.addr %s853, 8
        %s855 = scalar_lea.vmem %s7, %s854
      $region64: #{mixtral_sparse_moe_block.1} parent=59 // pred_fallthru
        _
    $region60: #{mixtral_sparse_moe_block.1} parent=5 // pred_fallthru
      _
  $region6: #{mixtral_sparse_moe_block.1} parent=0 // loop_footer
    %s27 = sadd.s32 1, %s23
  $region7: #{mixtral_sparse_moe_block.1} parent=0 // loop_footer_branch
    %22 = sbr.rel target = $region3
  $region8: #{mixtral_sparse_moe_block.1} parent=0 // loop_exit
    _

</llo_original>
